<compile_context>
chip_gen: v7x
topology: tpu7x:2x2x1
jax: 0.10.0
libtpu: 0.0.40
codegen_flags: <defaults>
</compile_context>

<pallas_src>
import functools

import jax
import jax.numpy as jnp
from jax import lax
from jax.experimental import pallas as pl
from jax.experimental.pallas import tpu as pltpu


def _mha_kernel(x_ref, wqkv_ref, wp_ref, bp_ref, out_ref, wei_ref, *,
                masked, num_heads, head_size):
    T = x_ref.shape[1]
    nhH = num_heads * head_size

    x = x_ref[0]                                                        # (T, C)

    # Single fused QKV projection: one MXU matmul with lane-dense N = 3*nh*H.
    qkv = jnp.dot(x, wqkv_ref[...], preferred_element_type=jnp.float32)  # (T, 3*nh*H)

    scale = head_size ** (-0.5)
    q = qkv[:, :nhH] * scale          # fold scale into q (O(T*H), not O(T^2))
    k = qkv[:, nhH:2 * nhH]
    v = qkv[:, 2 * nhH:]

    if masked:
        row = lax.broadcasted_iota(jnp.int32, (T, T), 0)
        col = lax.broadcasted_iota(jnp.int32, (T, T), 1)
        keep = col <= row            # diagonal always kept -> no all--inf rows

    head_outs = []
    for h in range(num_heads):        # static unroll; nh is small
        lo, hi = h * head_size, (h + 1) * head_size
        q_h = q[:, lo:hi]
        k_h = k[:, lo:hi]
        v_h = v[:, lo:hi]

        # Contract on the last dim of both operands (no explicit k.T transpose).
        wei = lax.dot_general(q_h, k_h, (((1,), (1,)), ((), ())),
                              preferred_element_type=jnp.float32)       # (T, T)
        if masked:
            wei = jnp.where(keep, wei, -jnp.inf)

        # Numerically-stable softmax along the last dim (f32 throughout).
        wei = wei - jnp.max(wei, axis=-1, keepdims=True)
        p = jnp.exp(wei)
        denom = jnp.sum(p, axis=-1, keepdims=True)
        p = p * pl.reciprocal(denom, approx=False)

        head_outs.append(jnp.dot(p, v_h, preferred_element_type=jnp.float32))
        wei_ref[0, h] = p.astype(wei_ref.dtype)

    # torch.cat([...], dim=-1): head axis contiguous in the last (lane) dim.
    concat = jnp.concatenate(head_outs, axis=-1)                        # (T, nh*H)

    # Fused output projection: y = concat @ Wp + b, written lane-dense as (T, C).
    y = jnp.dot(concat, wp_ref[...], preferred_element_type=jnp.float32) + bp_ref[0]
    out_ref[0] = y.astype(out_ref.dtype)


def multi_head_attention(x, wk, wq, wv, wp, bp, *, masked=True):
    """x: (B, T, C); wk/wq/wv: (nh, C, H); wp: (nh*H, C); bp: (1, C).

    Returns (proj, wei) with proj: (B, T, C) and wei: (B, nh, T, T); wei[:, h]
    equals the h-th head's attention probabilities from the PyTorch module.
    """
    B, T, C = x.shape
    nh, _, H = wk.shape
    nhH = nh * H

    # Pre-fuse per-head projection weights into one (C, 3*nh*H) matrix so the kernel
    # runs a single QKV matmul per batch.  Column block h of each third is head h's
    # weight (q | k | v sections).
    def _flat(w):  # (nh, C, H) -> (C, nh*H), head-major along the last dim
        return jnp.transpose(w, (1, 0, 2)).reshape(C, nhH)

    wqkv = jnp.concatenate([_flat(wq), _flat(wk), _flat(wv)], axis=-1)  # (C, 3*nh*H)

    kern = functools.partial(_mha_kernel, masked=masked, num_heads=nh, head_size=H)

    out, wei = pl.pallas_call(
        kern,
        out_shape=(
            jax.ShapeDtypeStruct((B, T, C), x.dtype),
            jax.ShapeDtypeStruct((B, nh, T, T), jnp.float32),
        ),
        grid=(B,),
        in_specs=[
            pl.BlockSpec((1, T, C), lambda b: (b, 0, 0)),
            pl.BlockSpec((C, 3 * nhH), lambda b: (0, 0)),
            pl.BlockSpec((nhH, C), lambda b: (0, 0)),
            pl.BlockSpec((1, C), lambda b: (0, 0)),
        ],
        out_specs=(
            pl.BlockSpec((1, T, C), lambda b: (b, 0, 0)),
            pl.BlockSpec((1, nh, T, T), lambda b: (b, 0, 0, 0)),
        ),
        compiler_params=pltpu.CompilerParams(
            dimension_semantics=("parallel",)),
    )(x, wqkv, wp, bp)

    return out, wei


def _reference(x, wk, wq, wv, wp, bp, *, masked=True):
    """Pure-JAX reference mirroring the PyTorch module (eval mode)."""
    B, T, C = x.shape
    nh, _, H = wk.shape
    outs, weis = [], []
    for h in range(nh):
        k = x @ wk[h]
        q = x @ wq[h]
        v = x @ wv[h]
        wei = (q @ jnp.swapaxes(k, -2, -1)) * (H ** -0.5)
        if masked:
            tri = jnp.tril(jnp.ones((T, T), dtype=bool))
            wei = jnp.where(tri, wei, -jnp.inf)
        wei = jax.nn.softmax(wei, axis=-1)
        outs.append(wei @ v)
        weis.append(wei)
    out2 = jnp.concatenate(outs, axis=-1)
    return out2 @ wp + bp[0], weis


if __name__ == "__main__":
    B, T = 2, 8
    n_embd, num_heads = 32, 4
    head_size = n_embd // num_heads
    masked = True

    key = jax.random.PRNGKey(0)
    kx, kk, kq, kv, kpw, kpb = jax.random.split(key, 6)

    x = jax.random.normal(kx, (B, T, n_embd), dtype=jnp.float32)

    # nn.Linear(n_embd, head_size, bias=False) per head; stored pre-transposed as (C, H).
    bound = 1.0 / (n_embd ** 0.5)
    wk = jax.random.uniform(kk, (num_heads, n_embd, head_size), jnp.float32, -bound, bound)
    wq = jax.random.uniform(kq, (num_heads, n_embd, head_size), jnp.float32, -bound, bound)
    wv = jax.random.uniform(kv, (num_heads, n_embd, head_size), jnp.float32, -bound, bound)

    # nn.Linear(hidden_dim * num_heads, n_embd) with bias; stored pre-transposed (in, out).
    bound_p = 1.0 / ((head_size * num_heads) ** 0.5)
    wp = jax.random.uniform(kpw, (head_size * num_heads, n_embd), jnp.float32, -bound_p, bound_p)
    bp = jax.random.uniform(kpb, (1, n_embd), jnp.float32, -bound_p, bound_p)

    out, wei = multi_head_attention(x, wk, wq, wv, wp, bp, masked=masked)
    out = jax.block_until_ready(out)
    wei = jax.block_until_ready(wei)

    ref_out, ref_weis = _reference(x, wk, wq, wv, wp, bp, masked=masked)
    assert out.shape == (B, T, n_embd)
    assert jnp.allclose(out, ref_out, atol=1e-5, rtol=1e-5)
    assert wei.shape == (B, num_heads, T, T)
    for h in range(num_heads):
        assert jnp.allclose(wei[:, h], ref_weis[h], atol=1e-5, rtol=1e-5)

    print("KERNEL_OK")
</pallas_src>

<mosaic_0001>
module attributes {stable_mosaic.version = 11 : i64} {
  func.func @_mha_kernel(%arg0: i32, %arg1: memref<1x8x32xf32, #tpu.memory_space<vmem>>, %arg2: memref<32x96xf32, #tpu.memory_space<vmem>>, %arg3: memref<32x32xf32, #tpu.memory_space<vmem>>, %arg4: memref<1x32xf32, #tpu.memory_space<vmem>>, %arg5: memref<1x8x32xf32, #tpu.memory_space<vmem>>, %arg6: memref<1x4x8x8xf32, #tpu.memory_space<vmem>>) attributes {dimension_semantics = [#tpu.dimension_semantics<parallel>], iteration_bounds = array<i64: 2>, scalar_prefetch = 0 : i64, scratch_operands = 0 : i64, tpu.core_type = #tpu.core_type<tc>, window_params = [{transform_indices = @transform_0, window_bounds = array<i64: 1, 8, 32>}, {pipeline_mode = #tpu.pipeline_mode<synchronous>, transform_indices = @transform_1, window_bounds = array<i64: 32, 96>}, {pipeline_mode = #tpu.pipeline_mode<synchronous>, transform_indices = @transform_2, window_bounds = array<i64: 32, 32>}, {pipeline_mode = #tpu.pipeline_mode<synchronous>, transform_indices = @transform_3, window_bounds = array<i64: 1, 32>}, {transform_indices = @transform_4, window_bounds = array<i64: 1, 8, 32>}, {transform_indices = @transform_5, window_bounds = array<i64: 1, 4, 8, 8>}]} {
    %c0 = arith.constant 0 : index
    %c0_0 = arith.constant 0 : index
    %c0_1 = arith.constant 0 : index
    %0 = vector.load %arg1[%c0, %c0_0, %c0_1] : memref<1x8x32xf32, #tpu.memory_space<vmem>>, vector<1x8x32xf32>
    %1 = vector.shape_cast %0 : vector<1x8x32xf32> to vector<8x32xf32>
    %c0_2 = arith.constant 0 : index
    %c0_3 = arith.constant 0 : index
    %2 = vector.load %arg2[%c0_2, %c0_3] : memref<32x96xf32, #tpu.memory_space<vmem>>, vector<32x96xf32>
    %cst = arith.constant dense<0.000000e+00> : vector<8x96xf32>
    %3 = tpu.matmul %1, %2, %cst {dimension_numbers = #tpu.dot_dimension_numbers<[1], [0], [0], [1], [0, 0, 1, 1], [], []>} : vector<8x32xf32>, vector<32x96xf32>, vector<8x96xf32> -> vector<8x96xf32>
    %4 = vector.extract_strided_slice %3 {offsets = [0, 0], sizes = [8, 32], strides = [1, 1]} : vector<8x96xf32> to vector<8x32xf32>
    %cst_4 = arith.constant 0.353553385 : f32
    %5 = vector.broadcast %cst_4 : f32 to vector<8x32xf32>
    %6 = arith.mulf %4, %5 : vector<8x32xf32>
    %7 = vector.extract_strided_slice %3 {offsets = [0, 32], sizes = [8, 32], strides = [1, 1]} : vector<8x96xf32> to vector<8x32xf32>
    %8 = vector.extract_strided_slice %3 {offsets = [0, 64], sizes = [8, 32], strides = [1, 1]} : vector<8x96xf32> to vector<8x32xf32>
    %9 = tpu.iota {dimensions = array<i32: 0>} : vector<8x8xi32>
    %10 = tpu.iota {dimensions = array<i32: 1>} : vector<8x8xi32>
    %11 = arith.cmpi sle, %10, %9 : vector<8x8xi32>
    %12 = vector.extract_strided_slice %6 {offsets = [0, 0], sizes = [8, 8], strides = [1, 1]} : vector<8x32xf32> to vector<8x8xf32>
    %13 = vector.extract_strided_slice %7 {offsets = [0, 0], sizes = [8, 8], strides = [1, 1]} : vector<8x32xf32> to vector<8x8xf32>
    %14 = vector.extract_strided_slice %8 {offsets = [0, 0], sizes = [8, 8], strides = [1, 1]} : vector<8x32xf32> to vector<8x8xf32>
    %cst_5 = arith.constant dense<0.000000e+00> : vector<8x8xf32>
    %15 = tpu.matmul %12, %13, %cst_5 {dimension_numbers = #tpu.dot_dimension_numbers<[1], [1], [0], [0], [0, 0, 1, 0], [], []>} : vector<8x8xf32>, vector<8x8xf32>, vector<8x8xf32> -> vector<8x8xf32>
    %cst_6 = arith.constant 0xFF800000 : f32
    %16 = vector.broadcast %cst_6 : f32 to vector<8x8xf32>
    %17 = arith.select %11, %15, %16 : vector<8x8xi1>, vector<8x8xf32>
    %cst_7 = arith.constant dense<0xFF800000> : vector<8xf32>
    %18 = vector.multi_reduction <maximumf>, %17, %cst_7 [1] : vector<8x8xf32> to vector<8xf32>
    %19 = vector.shape_cast %18 : vector<8xf32> to vector<8x1xf32>
    %20 = vector.broadcast %19 : vector<8x1xf32> to vector<8x8xf32>
    %21 = arith.subf %17, %20 : vector<8x8xf32>
    %22 = math.exp %21 : vector<8x8xf32>
    %cst_8 = arith.constant dense<0.000000e+00> : vector<8xf32>
    %23 = vector.multi_reduction <add>, %22, %cst_8 [1] : vector<8x8xf32> to vector<8xf32>
    %24 = vector.shape_cast %23 : vector<8xf32> to vector<8x1xf32>
    %25 = tpu.reciprocal %24 : vector<8x1xf32> -> vector<8x1xf32>
    %26 = vector.broadcast %25 : vector<8x1xf32> to vector<8x8xf32>
    %27 = arith.mulf %22, %26 : vector<8x8xf32>
    %cst_9 = arith.constant dense<0.000000e+00> : vector<8x8xf32>
    %28 = tpu.matmul %27, %14, %cst_9 {dimension_numbers = #tpu.dot_dimension_numbers<[1], [0], [0], [1], [0, 0, 1, 1], [], []>} : vector<8x8xf32>, vector<8x8xf32>, vector<8x8xf32> -> vector<8x8xf32>
    %c0_10 = arith.constant 0 : index
    %c0_11 = arith.constant 0 : index
    %c0_12 = arith.constant 0 : index
    %c0_13 = arith.constant 0 : index
    %29 = vector.load %arg6[%c0_10, %c0_11, %c0_12, %c0_13] : memref<1x4x8x8xf32, #tpu.memory_space<vmem>>, vector<1x1x8x8xf32>
    %30 = vector.shape_cast %29 : vector<1x1x8x8xf32> to vector<8x8xf32>
    %31 = vector.shape_cast %27 : vector<8x8xf32> to vector<1x1x8x8xf32>
    tpu.vector_store %arg6[%c0_10, %c0_11, %c0_12, %c0_13], %31 {strides = array<i32>} : memref<1x4x8x8xf32, #tpu.memory_space<vmem>>, vector<1x1x8x8xf32>,
    %32 = vector.extract_strided_slice %6 {offsets = [0, 8], sizes = [8, 8], strides = [1, 1]} : vector<8x32xf32> to vector<8x8xf32>
    %33 = vector.extract_strided_slice %7 {offsets = [0, 8], sizes = [8, 8], strides = [1, 1]} : vector<8x32xf32> to vector<8x8xf32>
    %34 = vector.extract_strided_slice %8 {offsets = [0, 8], sizes = [8, 8], strides = [1, 1]} : vector<8x32xf32> to vector<8x8xf32>
    %cst_14 = arith.constant dense<0.000000e+00> : vector<8x8xf32>
    %35 = tpu.matmul %32, %33, %cst_14 {dimension_numbers = #tpu.dot_dimension_numbers<[1], [1], [0], [0], [0, 0, 1, 0], [], []>} : vector<8x8xf32>, vector<8x8xf32>, vector<8x8xf32> -> vector<8x8xf32>
    %cst_15 = arith.constant 0xFF800000 : f32
    %36 = vector.broadcast %cst_15 : f32 to vector<8x8xf32>
    %37 = arith.select %11, %35, %36 : vector<8x8xi1>, vector<8x8xf32>
    %cst_16 = arith.constant dense<0xFF800000> : vector<8xf32>
    %38 = vector.multi_reduction <maximumf>, %37, %cst_16 [1] : vector<8x8xf32> to vector<8xf32>
    %39 = vector.shape_cast %38 : vector<8xf32> to vector<8x1xf32>
    %40 = vector.broadcast %39 : vector<8x1xf32> to vector<8x8xf32>
    %41 = arith.subf %37, %40 : vector<8x8xf32>
    %42 = math.exp %41 : vector<8x8xf32>
    %cst_17 = arith.constant dense<0.000000e+00> : vector<8xf32>
    %43 = vector.multi_reduction <add>, %42, %cst_17 [1] : vector<8x8xf32> to vector<8xf32>
    %44 = vector.shape_cast %43 : vector<8xf32> to vector<8x1xf32>
    %45 = tpu.reciprocal %44 : vector<8x1xf32> -> vector<8x1xf32>
    %46 = vector.broadcast %45 : vector<8x1xf32> to vector<8x8xf32>
    %47 = arith.mulf %42, %46 : vector<8x8xf32>
    %cst_18 = arith.constant dense<0.000000e+00> : vector<8x8xf32>
    %48 = tpu.matmul %47, %34, %cst_18 {dimension_numbers = #tpu.dot_dimension_numbers<[1], [0], [0], [1], [0, 0, 1, 1], [], []>} : vector<8x8xf32>, vector<8x8xf32>, vector<8x8xf32> -> vector<8x8xf32>
    %c0_19 = arith.constant 0 : index
    %c1 = arith.constant 1 : index
    %c0_20 = arith.constant 0 : index
    %c0_21 = arith.constant 0 : index
    %49 = vector.load %arg6[%c0_19, %c1, %c0_20, %c0_21] : memref<1x4x8x8xf32, #tpu.memory_space<vmem>>, vector<1x1x8x8xf32>
    %50 = vector.shape_cast %49 : vector<1x1x8x8xf32> to vector<8x8xf32>
    %51 = vector.shape_cast %47 : vector<8x8xf32> to vector<1x1x8x8xf32>
    tpu.vector_store %arg6[%c0_19, %c1, %c0_20, %c0_21], %51 {strides = array<i32>} : memref<1x4x8x8xf32, #tpu.memory_space<vmem>>, vector<1x1x8x8xf32>,
    %52 = vector.extract_strided_slice %6 {offsets = [0, 16], sizes = [8, 8], strides = [1, 1]} : vector<8x32xf32> to vector<8x8xf32>
    %53 = vector.extract_strided_slice %7 {offsets = [0, 16], sizes = [8, 8], strides = [1, 1]} : vector<8x32xf32> to vector<8x8xf32>
    %54 = vector.extract_strided_slice %8 {offsets = [0, 16], sizes = [8, 8], strides = [1, 1]} : vector<8x32xf32> to vector<8x8xf32>
    %cst_22 = arith.constant dense<0.000000e+00> : vector<8x8xf32>
    %55 = tpu.matmul %52, %53, %cst_22 {dimension_numbers = #tpu.dot_dimension_numbers<[1], [1], [0], [0], [0, 0, 1, 0], [], []>} : vector<8x8xf32>, vector<8x8xf32>, vector<8x8xf32> -> vector<8x8xf32>
    %cst_23 = arith.constant 0xFF800000 : f32
    %56 = vector.broadcast %cst_23 : f32 to vector<8x8xf32>
    %57 = arith.select %11, %55, %56 : vector<8x8xi1>, vector<8x8xf32>
    %cst_24 = arith.constant dense<0xFF800000> : vector<8xf32>
    %58 = vector.multi_reduction <maximumf>, %57, %cst_24 [1] : vector<8x8xf32> to vector<8xf32>
    %59 = vector.shape_cast %58 : vector<8xf32> to vector<8x1xf32>
    %60 = vector.broadcast %59 : vector<8x1xf32> to vector<8x8xf32>
    %61 = arith.subf %57, %60 : vector<8x8xf32>
    %62 = math.exp %61 : vector<8x8xf32>
    %cst_25 = arith.constant dense<0.000000e+00> : vector<8xf32>
    %63 = vector.multi_reduction <add>, %62, %cst_25 [1] : vector<8x8xf32> to vector<8xf32>
    %64 = vector.shape_cast %63 : vector<8xf32> to vector<8x1xf32>
    %65 = tpu.reciprocal %64 : vector<8x1xf32> -> vector<8x1xf32>
    %66 = vector.broadcast %65 : vector<8x1xf32> to vector<8x8xf32>
    %67 = arith.mulf %62, %66 : vector<8x8xf32>
    %cst_26 = arith.constant dense<0.000000e+00> : vector<8x8xf32>
    %68 = tpu.matmul %67, %54, %cst_26 {dimension_numbers = #tpu.dot_dimension_numbers<[1], [0], [0], [1], [0, 0, 1, 1], [], []>} : vector<8x8xf32>, vector<8x8xf32>, vector<8x8xf32> -> vector<8x8xf32>
    %c0_27 = arith.constant 0 : index
    %c2 = arith.constant 2 : index
    %c0_28 = arith.constant 0 : index
    %c0_29 = arith.constant 0 : index
    %69 = vector.load %arg6[%c0_27, %c2, %c0_28, %c0_29] : memref<1x4x8x8xf32, #tpu.memory_space<vmem>>, vector<1x1x8x8xf32>
    %70 = vector.shape_cast %69 : vector<1x1x8x8xf32> to vector<8x8xf32>
    %71 = vector.shape_cast %67 : vector<8x8xf32> to vector<1x1x8x8xf32>
    tpu.vector_store %arg6[%c0_27, %c2, %c0_28, %c0_29], %71 {strides = array<i32>} : memref<1x4x8x8xf32, #tpu.memory_space<vmem>>, vector<1x1x8x8xf32>,
    %72 = vector.extract_strided_slice %6 {offsets = [0, 24], sizes = [8, 8], strides = [1, 1]} : vector<8x32xf32> to vector<8x8xf32>
    %73 = vector.extract_strided_slice %7 {offsets = [0, 24], sizes = [8, 8], strides = [1, 1]} : vector<8x32xf32> to vector<8x8xf32>
    %74 = vector.extract_strided_slice %8 {offsets = [0, 24], sizes = [8, 8], strides = [1, 1]} : vector<8x32xf32> to vector<8x8xf32>
    %cst_30 = arith.constant dense<0.000000e+00> : vector<8x8xf32>
    %75 = tpu.matmul %72, %73, %cst_30 {dimension_numbers = #tpu.dot_dimension_numbers<[1], [1], [0], [0], [0, 0, 1, 0], [], []>} : vector<8x8xf32>, vector<8x8xf32>, vector<8x8xf32> -> vector<8x8xf32>
    %cst_31 = arith.constant 0xFF800000 : f32
    %76 = vector.broadcast %cst_31 : f32 to vector<8x8xf32>
    %77 = arith.select %11, %75, %76 : vector<8x8xi1>, vector<8x8xf32>
    %cst_32 = arith.constant dense<0xFF800000> : vector<8xf32>
    %78 = vector.multi_reduction <maximumf>, %77, %cst_32 [1] : vector<8x8xf32> to vector<8xf32>
    %79 = vector.shape_cast %78 : vector<8xf32> to vector<8x1xf32>
    %80 = vector.broadcast %79 : vector<8x1xf32> to vector<8x8xf32>
    %81 = arith.subf %77, %80 : vector<8x8xf32>
    %82 = math.exp %81 : vector<8x8xf32>
    %cst_33 = arith.constant dense<0.000000e+00> : vector<8xf32>
    %83 = vector.multi_reduction <add>, %82, %cst_33 [1] : vector<8x8xf32> to vector<8xf32>
    %84 = vector.shape_cast %83 : vector<8xf32> to vector<8x1xf32>
    %85 = tpu.reciprocal %84 : vector<8x1xf32> -> vector<8x1xf32>
    %86 = vector.broadcast %85 : vector<8x1xf32> to vector<8x8xf32>
    %87 = arith.mulf %82, %86 : vector<8x8xf32>
    %cst_34 = arith.constant dense<0.000000e+00> : vector<8x8xf32>
    %88 = tpu.matmul %87, %74, %cst_34 {dimension_numbers = #tpu.dot_dimension_numbers<[1], [0], [0], [1], [0, 0, 1, 1], [], []>} : vector<8x8xf32>, vector<8x8xf32>, vector<8x8xf32> -> vector<8x8xf32>
    %c0_35 = arith.constant 0 : index
    %c3 = arith.constant 3 : index
    %c0_36 = arith.constant 0 : index
    %c0_37 = arith.constant 0 : index
    %89 = vector.load %arg6[%c0_35, %c3, %c0_36, %c0_37] : memref<1x4x8x8xf32, #tpu.memory_space<vmem>>, vector<1x1x8x8xf32>
    %90 = vector.shape_cast %89 : vector<1x1x8x8xf32> to vector<8x8xf32>
    %91 = vector.shape_cast %87 : vector<8x8xf32> to vector<1x1x8x8xf32>
    tpu.vector_store %arg6[%c0_35, %c3, %c0_36, %c0_37], %91 {strides = array<i32>} : memref<1x4x8x8xf32, #tpu.memory_space<vmem>>, vector<1x1x8x8xf32>,
    %92 = tpu.concatenate %28, %48, %68, %88 in 1 : vector<8x8xf32>, vector<8x8xf32>, vector<8x8xf32>, vector<8x8xf32> -> vector<8x32xf32>
    %c0_38 = arith.constant 0 : index
    %c0_39 = arith.constant 0 : index
    %93 = vector.load %arg3[%c0_38, %c0_39] : memref<32x32xf32, #tpu.memory_space<vmem>>, vector<32x32xf32>
    %cst_40 = arith.constant dense<0.000000e+00> : vector<8x32xf32>
    %94 = tpu.matmul %92, %93, %cst_40 {dimension_numbers = #tpu.dot_dimension_numbers<[1], [0], [0], [1], [0, 0, 1, 1], [], []>} : vector<8x32xf32>, vector<32x32xf32>, vector<8x32xf32> -> vector<8x32xf32>
    %c0_41 = arith.constant 0 : index
    %c0_42 = arith.constant 0 : index
    %95 = vector.load %arg4[%c0_41, %c0_42] : memref<1x32xf32, #tpu.memory_space<vmem>>, vector<1x32xf32>
    %96 = vector.shape_cast %95 : vector<1x32xf32> to vector<32xf32>
    %97 = vector.shape_cast %96 : vector<32xf32> to vector<1x32xf32>
    %98 = vector.broadcast %97 : vector<1x32xf32> to vector<8x32xf32>
    %99 = arith.addf %94, %98 : vector<8x32xf32>
    %c0_43 = arith.constant 0 : index
    %c0_44 = arith.constant 0 : index
    %c0_45 = arith.constant 0 : index
    %100 = vector.load %arg5[%c0_43, %c0_44, %c0_45] : memref<1x8x32xf32, #tpu.memory_space<vmem>>, vector<1x8x32xf32>
    %101 = vector.shape_cast %100 : vector<1x8x32xf32> to vector<8x32xf32>
    %102 = vector.shape_cast %99 : vector<8x32xf32> to vector<1x8x32xf32>
    tpu.vector_store %arg5[%c0_43, %c0_44, %c0_45], %102 {strides = array<i32>} : memref<1x8x32xf32, #tpu.memory_space<vmem>>, vector<1x8x32xf32>,
    return
  }
  func.func @transform_0(%arg0: i32) -> (i32, i32, i32) {
    %c0_i32 = arith.constant 0 : i32
    %c0_i32_0 = arith.constant 0 : i32
    %c0_i32_1 = arith.constant 0 : i32
    return %arg0, %c0_i32, %c0_i32_0 : i32, i32, i32
  }
  func.func @transform_1(%arg0: i32) -> (i32, i32) {
    %c0_i32 = arith.constant 0 : i32
    %c0_i32_0 = arith.constant 0 : i32
    %c0_i32_1 = arith.constant 0 : i32
    return %c0_i32, %c0_i32_0 : i32, i32
  }
  func.func @transform_2(%arg0: i32) -> (i32, i32) {
    %c0_i32 = arith.constant 0 : i32
    %c0_i32_0 = arith.constant 0 : i32
    %c0_i32_1 = arith.constant 0 : i32
    return %c0_i32, %c0_i32_0 : i32, i32
  }
  func.func @transform_3(%arg0: i32) -> (i32, i32) {
    %c0_i32 = arith.constant 0 : i32
    %c0_i32_0 = arith.constant 0 : i32
    %c0_i32_1 = arith.constant 0 : i32
    return %c0_i32, %c0_i32_0 : i32, i32
  }
  func.func @transform_4(%arg0: i32) -> (i32, i32, i32) {
    %c0_i32 = arith.constant 0 : i32
    %c0_i32_0 = arith.constant 0 : i32
    %c0_i32_1 = arith.constant 0 : i32
    return %arg0, %c0_i32, %c0_i32_0 : i32, i32, i32
  }
  func.func @transform_5(%arg0: i32) -> (i32, i32, i32, i32) {
    %c0_i32 = arith.constant 0 : i32
    %c0_i32_0 = arith.constant 0 : i32
    %c0_i32_1 = arith.constant 0 : i32
    %c0_i32_2 = arith.constant 0 : i32
    return %arg0, %c0_i32, %c0_i32_0, %c0_i32_1 : i32, i32, i32, i32
  }
}

</mosaic_0001>

<llo_original>
// kernel: tpu_custom_call.1
$region0: #{tpu_custom_call.1}
  #allocation0 [shape = 'u32[]', space=smem, size = 0x4, offset = 0x4, fixed_abs, tag = 'smem constant byte address 0x4 - core index']
  #allocation1 [shape = 'u32[144,128]{1,0:T(1,128)}', space=vmem, size = 0x12000, scoped, tag = 'internal scratch']
  %s0 = inlined_call_operand.hbm [shape: f32[2,8,32], index: 0, kind: input, shape index: {}]
  %s1 = inlined_call_operand.hbm [shape: f32[32,96], index: 1, kind: input, shape index: {}]
  %s2 = inlined_call_operand.hbm [shape: f32[32,32], index: 2, kind: input, shape index: {}]
  %s3 = inlined_call_operand.vmem [shape: f32[1,32], index: 3, kind: input, shape index: {}]
  %s4 = inlined_call_operand.hbm [shape: f32[2,8,32], index: 4, kind: output, shape index: {0}]
  %s5 = inlined_call_operand.hbm [shape: f32[2,4,8,8], index: 5, kind: output, shape index: {1}]
  %6 = xla_tuple %s4, %s5
  %s7 = sld [smem:[#allocation0]]
  $region69: #{tpu_custom_call.1} parent=0
    _
  %s9 = ssub.s32 1, %s7
  %s10 = scalar_select 0, %s9, %s7
  $region1: #{tpu_custom_call.1} parent=0
    #allocation2 [shape = 'u8[8192]{0}', space=vmem, size = 0x2000, scoped, tag = 'input window, operand 0']
    #allocation3 [shape = 's32[2]{0}', space=sflag, size = 0x8, scoped, tag = 'scoped memory for tpu_custom_call.1']
    #allocation4 [shape = 's32[2]{0}', space=sflag, size = 0x8, scoped, tag = 'scoped memory for tpu_custom_call.1']
    #allocation5 [shape = 'u8[16384]{0}', space=vmem, size = 0x4000, scoped, tag = 'input window, operand 1, single buffered']
    #allocation6 [shape = 's32[1]{0}', space=sflag, size = 0x4, scoped, tag = 'scoped memory for tpu_custom_call.1']
    #allocation7 [shape = 'u8[16384]{0}', space=vmem, size = 0x4000, scoped, tag = 'input window, operand 2, single buffered']
    #allocation8 [shape = 'u8[8192]{0}', space=vmem, size = 0x2000, scoped, tag = 'output window, operand 0']
    #allocation9 [shape = 'u8[32768]{0}', space=vmem, size = 0x8000, scoped, tag = 'output window, operand 1']
    #allocation10 [shape = 's32[2]{0}', space=sflag, size = 0x8, scoped, tag = 'scoped memory for tpu_custom_call.1']
    %11 = vsyncpa [#allocation3], 0
    %s12 = scalar_lea.sflag [#allocation3], 1
    %13 = vsyncpa %s12, 0
    %14 = vsyncpa [#allocation6], 0
    %15 = vsyncpa [#allocation4], 0
    %s16 = scalar_lea.sflag [#allocation4], 1
    %17 = vsyncpa %s16, 0
    %18 = vsyncpa [#allocation10], 0
    %s19 = scalar_lea.sflag [#allocation10], 1
    %20 = vsyncpa %s19, 0
    loop: start=0, step=1, limit=4
    $region2: #{tpu_custom_call.1} parent=1 // loop_pre_header
      _
    $region3: #{tpu_custom_call.1} parent=1 // loop_header
      %s22 = sphi 0, %s26
      %p23 = scmp.ge.s32.totalorder %s22, 4
      %s32 = sphi 0, %s34
      %s35 = sphi 0, %s32
      %s36 = sphi 0, %s35
      %s52 = sphi 0, %s36
      %s56 = sphi 0, %s56
      %s58 = sphi 0, %s56
      %s59 = sphi 0, %s58
      %s73 = sphi 0, %s59
      %s77 = sphi 0, %s77
      %s79 = sphi 0, %s77
      %s80 = sphi 0, %s79
      %s94 = sphi 0, %s80
      %s98 = sphi 0, %s98
      %s100 = sphi 0, %s98
      %s101 = sphi 0, %s100
      %s115 = sphi 0, %s101
      %s121 = sphi 0, %s123
      %s124 = sphi 0, %s121
      %s125 = sphi 0, %s124
      %s141 = sphi 0, %s125
      %s147 = sphi 0, %s149
      %s150 = sphi 0, %s147
      %s151 = sphi 0, %s150
      %s167 = sphi 0, %s151
    $region4: #{tpu_custom_call.1} parent=1 // loop_header_branch
      %25 = sbr.rel (%p23) target = $region8
    $region5: #{tpu_custom_call.1} parent=1 // loop_body
      %s27 = ssub.s32 %s22, 1
      %s28 = ssub.s32 %s22, 2
      %s29 = sadd.s32 %s22, 1
      %s30 = ssub.s32 %s22, %s29
      %p31 = scmp.eq.s32.totalorder %s30, 0
      %s33 = sadd.s32 %s32, 1
      %s34 = scalar_select %p31, %s32, %s33
      %p37 = pneg %p31
      %p38 = scmp.eq.s32.totalorder %s22, 1
      %p39 = por %p37, %p38
      %p40 = scmp.ne.s32.totalorder %s32, %s35
      %p41 = scmp.eq.s32.totalorder %s22, 0
      %p42 = por %p40, %p41
      %p43 = scmp.ne.s32.totalorder %s32, %s35
      %p44 = scmp.eq.s32.totalorder %s27, 1
      %p45 = por %p43, %p44
      %p46 = scmp.ne.s32.totalorder %s35, %s36
      %p47 = scmp.eq.s32.totalorder %s27, 0
      %p48 = por %p46, %p47
      %p49 = scmp.ne.s32.totalorder %s35, %s36
      %p50 = scmp.eq.s32.totalorder %s28, 1
      %p51 = por %p49, %p50
      %p53 = scmp.ne.s32.totalorder %s36, %s52
      %p54 = scmp.eq.s32.totalorder %s28, 0
      %p55 = por %p53, %p54
      %s57 = sadd.s32 %s56, 1
      %p60 = scmp.eq.s32.totalorder %s22, 1
      %p61 = scmp.ne.s32.totalorder %s56, %s58
      %p62 = scmp.eq.s32.totalorder %s22, 0
      %p63 = por %p61, %p62
      %p64 = scmp.ne.s32.totalorder %s56, %s58
      %p65 = scmp.eq.s32.totalorder %s27, 1
      %p66 = por %p64, %p65
      %p67 = scmp.ne.s32.totalorder %s58, %s59
      %p68 = scmp.eq.s32.totalorder %s27, 0
      %p69 = por %p67, %p68
      %p70 = scmp.ne.s32.totalorder %s58, %s59
      %p71 = scmp.eq.s32.totalorder %s28, 1
      %p72 = por %p70, %p71
      %p74 = scmp.ne.s32.totalorder %s59, %s73
      %p75 = scmp.eq.s32.totalorder %s28, 0
      %p76 = por %p74, %p75
      %s78 = sadd.s32 %s77, 1
      %p81 = scmp.eq.s32.totalorder %s22, 1
      %p82 = scmp.ne.s32.totalorder %s77, %s79
      %p83 = scmp.eq.s32.totalorder %s22, 0
      %p84 = por %p82, %p83
      %p85 = scmp.ne.s32.totalorder %s77, %s79
      %p86 = scmp.eq.s32.totalorder %s27, 1
      %p87 = por %p85, %p86
      %p88 = scmp.ne.s32.totalorder %s79, %s80
      %p89 = scmp.eq.s32.totalorder %s27, 0
      %p90 = por %p88, %p89
      %p91 = scmp.ne.s32.totalorder %s79, %s80
      %p92 = scmp.eq.s32.totalorder %s28, 1
      %p93 = por %p91, %p92
      %p95 = scmp.ne.s32.totalorder %s80, %s94
      %p96 = scmp.eq.s32.totalorder %s28, 0
      %p97 = por %p95, %p96
      %s99 = sadd.s32 %s98, 1
      %p102 = scmp.eq.s32.totalorder %s22, 1
      %p103 = scmp.ne.s32.totalorder %s98, %s100
      %p104 = scmp.eq.s32.totalorder %s22, 0
      %p105 = por %p103, %p104
      %p106 = scmp.ne.s32.totalorder %s98, %s100
      %p107 = scmp.eq.s32.totalorder %s27, 1
      %p108 = por %p106, %p107
      %p109 = scmp.ne.s32.totalorder %s100, %s101
      %p110 = scmp.eq.s32.totalorder %s27, 0
      %p111 = por %p109, %p110
      %p112 = scmp.ne.s32.totalorder %s100, %s101
      %p113 = scmp.eq.s32.totalorder %s28, 1
      %p114 = por %p112, %p113
      %p116 = scmp.ne.s32.totalorder %s101, %s115
      %p117 = scmp.eq.s32.totalorder %s28, 0
      %p118 = por %p116, %p117
      %s119 = ssub.s32 %s22, %s29
      %p120 = scmp.eq.s32.totalorder %s119, 0
      %s122 = sadd.s32 %s121, 1
      %s123 = scalar_select %p120, %s121, %s122
      %p126 = pneg %p120
      %p127 = scmp.eq.s32.totalorder %s22, 1
      %p128 = por %p126, %p127
      %p129 = scmp.ne.s32.totalorder %s121, %s124
      %p130 = scmp.eq.s32.totalorder %s22, 0
      %p131 = por %p129, %p130
      %p132 = scmp.ne.s32.totalorder %s121, %s124
      %p133 = scmp.eq.s32.totalorder %s27, 1
      %p134 = por %p132, %p133
      %p135 = scmp.ne.s32.totalorder %s124, %s125
      %p136 = scmp.eq.s32.totalorder %s27, 0
      %p137 = por %p135, %p136
      %p138 = scmp.ne.s32.totalorder %s124, %s125
      %p139 = scmp.eq.s32.totalorder %s28, 1
      %p140 = por %p138, %p139
      %p142 = scmp.ne.s32.totalorder %s125, %s141
      %p143 = scmp.eq.s32.totalorder %s28, 0
      %p144 = por %p142, %p143
      %s145 = ssub.s32 %s22, %s29
      %p146 = scmp.eq.s32.totalorder %s145, 0
      %s148 = sadd.s32 %s147, 1
      %s149 = scalar_select %p146, %s147, %s148
      %p152 = pneg %p146
      %p153 = scmp.eq.s32.totalorder %s22, 1
      %p154 = por %p152, %p153
      %p155 = scmp.ne.s32.totalorder %s147, %s150
      %p156 = scmp.eq.s32.totalorder %s22, 0
      %p157 = por %p155, %p156
      %p158 = scmp.ne.s32.totalorder %s147, %s150
      %p159 = scmp.eq.s32.totalorder %s27, 1
      %p160 = por %p158, %p159
      %p161 = scmp.ne.s32.totalorder %s150, %s151
      %p162 = scmp.eq.s32.totalorder %s27, 0
      %p163 = por %p161, %p162
      %p164 = scmp.ne.s32.totalorder %s150, %s151
      %p165 = scmp.eq.s32.totalorder %s28, 1
      %p166 = por %p164, %p165
      %p168 = scmp.ne.s32.totalorder %s151, %s167
      %p169 = scmp.eq.s32.totalorder %s28, 0
      %p170 = por %p168, %p169
      %p171 = scmp.le.s32.totalorder 1, %s22
      %p172 = scmp.lt.s32.totalorder %s22, 3
      %p173 = pnand %p171, %p172
      %p174 = pneg %p173
      // Predicated region
      $region9: #{tpu_custom_call.1} parent=5 // pred_check
        _
      $region10: #{tpu_custom_call.1} parent=5 // pred_check_branch
        %176 = sbr.rel (%p173) target = $region12
      $region11: #{tpu_custom_call.1} parent=5 // pred_region
        %s177 = ssub.s32 %s22, 1
        // Predicated region
        $region13: #{tpu_custom_call.1} parent=11 // pred_check
          %p178 = pneg %p69
        $region14: #{tpu_custom_call.1} parent=11 // pred_check_branch
          %180 = sbr.rel (%p178) target = $region16
        $region15: #{tpu_custom_call.1} parent=11 // pred_region
          %s182 = ssub.s32 512, 512
          %183 = vsyncadd [#allocation6], %s182
          %s184 = sshll.u32 [#allocation5], 4
          %s185 = int_to_ptr.vmem [resolvable:$true] %s184
          %190 = dma.hbm_to_vmem [thread:$0]  %s1, 512, %s185, [#allocation6], 128, 128, 8
        $region16: #{tpu_custom_call.1} parent=11 // pred_fallthru
          _
        // Predicated region
        $region17: #{tpu_custom_call.1} parent=11 // pred_check
          %p191 = pneg %p90
        $region18: #{tpu_custom_call.1} parent=11 // pred_check_branch
          %193 = sbr.rel (%p191) target = $region20
        $region19: #{tpu_custom_call.1} parent=11 // pred_region
          %s195 = ssub.s32 512, 512
          %196 = vsyncadd [#allocation6], %s195
          %s197 = sshll.u32 [#allocation7], 4
          %s198 = int_to_ptr.vmem [resolvable:$true] %s197
          %203 = dma.hbm_to_vmem [thread:$0]  %s2, 512, %s198, [#allocation6], 128, 128, 8
        $region20: #{tpu_custom_call.1} parent=11 // pred_fallthru
          _
        // Predicated region
        $region21: #{tpu_custom_call.1} parent=11 // pred_check
          %p204 = pneg %p111
        $region22: #{tpu_custom_call.1} parent=11 // pred_check_branch
          %206 = sbr.rel (%p204) target = $region24
        $region23: #{tpu_custom_call.1} parent=11 // pred_region
          _
        $region24: #{tpu_custom_call.1} parent=11 // pred_fallthru
          _
      $region12: #{tpu_custom_call.1} parent=5 // pred_fallthru
        _
      %p207 = scmp.lt.s32.totalorder %s22, 2
      // Predicated region
      $region25: #{tpu_custom_call.1} parent=5 // pred_check
        %p208 = pneg %p207
      $region26: #{tpu_custom_call.1} parent=5 // pred_check_branch
        %210 = sbr.rel (%p208) target = $region28
      $region27: #{tpu_custom_call.1} parent=5 // pred_region
        // Predicated region
        $region29: #{tpu_custom_call.1} parent=27 // pred_check
          %p211 = pneg %p42
        $region30: #{tpu_custom_call.1} parent=27 // pred_check_branch
          %213 = sbr.rel (%p211) target = $region32
        $region31: #{tpu_custom_call.1} parent=27 // pred_region
          %s214 = sand.u32 %s32, 1
          %s215 = scalar_lea.sflag [#allocation3], %s214
          %s216 = sand.u32 %s32, 1
          %s217 = smul.addr %s216, 8
          %s218 = scalar_lea.vmem [#allocation2], %s217
          %s220 = ssub.s32 128, 128
          %221 = vsyncadd %s215, %s220
          %s222 = smul.addr %s22, 128
          %s223 = scalar_lea.hbm %s0, %s222
          %s225 = sshll.u32 %s218, 4
          %s226 = int_to_ptr.vmem [resolvable:$true] %s225
          %228 = dma.hbm_to_vmem [thread:$0]  %s223, 128, %s226, %s215
        $region32: #{tpu_custom_call.1} parent=27 // pred_fallthru
          _
      $region28: #{tpu_custom_call.1} parent=5 // pred_fallthru
        _
      %p229 = scmp.le.s32.totalorder 1, %s22
      %p230 = scmp.lt.s32.totalorder %s22, 3
      %p231 = pnand %p229, %p230
      %p232 = pneg %p231
      // Predicated region
      $region33: #{tpu_custom_call.1} parent=5 // pred_check
        _
      $region34: #{tpu_custom_call.1} parent=5 // pred_check_branch
        %234 = sbr.rel (%p231) target = $region36
      $region35: #{tpu_custom_call.1} parent=5 // pred_region
        %s235 = ssub.s32 %s22, 1
        %s236 = sand.u32 %s35, 1
        %s237 = scalar_lea.sflag [#allocation3], %s236
        %s238 = sand.u32 %s35, 1
        %s239 = smul.addr %s238, 8
        %s240 = scalar_lea.vmem [#allocation2], %s239
        // Predicated region
        $region37: #{tpu_custom_call.1} parent=35 // pred_check
          %p241 = pneg %p48
        $region38: #{tpu_custom_call.1} parent=35 // pred_check_branch
          %243 = sbr.rel (%p241) target = $region40
        $region39: #{tpu_custom_call.1} parent=35 // pred_region
          %244 = dma.done %s237, 128
        $region40: #{tpu_custom_call.1} parent=35 // pred_fallthru
          _
        // Predicated region
        $region41: #{tpu_custom_call.1} parent=35 // pred_check
          %p245 = pneg %p69
        $region42: #{tpu_custom_call.1} parent=35 // pred_check_branch
          %247 = sbr.rel (%p245) target = $region44
        $region43: #{tpu_custom_call.1} parent=35 // pred_region
          %248 = dma.done [#allocation6], 512
        $region44: #{tpu_custom_call.1} parent=35 // pred_fallthru
          _
        // Predicated region
        $region45: #{tpu_custom_call.1} parent=35 // pred_check
          %p249 = pneg %p90
        $region46: #{tpu_custom_call.1} parent=35 // pred_check_branch
          %251 = sbr.rel (%p249) target = $region48
        $region47: #{tpu_custom_call.1} parent=35 // pred_region
          %252 = dma.done [#allocation6], 512
        $region48: #{tpu_custom_call.1} parent=35 // pred_fallthru
          _
        %s253 = sand.u32 %s35, 1
        %s254 = scalar_lea.sflag [#allocation3], %s253
        %s255 = sand.u32 %s35, 1
        %s256 = smul.addr %s255, 8
        %s257 = scalar_lea.vmem [#allocation2], %s256
        %p258 = pneg %p48
        %p259 = pneg %p45
        %p260 = pneg %p69
        %p261 = pneg %p66
        %p262 = pneg %p90
        %p263 = pneg %p87
        %p264 = pneg %p111
        %p265 = pneg %p108
        %p266 = pneg %p137
        %p267 = pneg %p134
        %s268 = sand.u32 %s124, 1
        %s269 = scalar_lea.sflag [#allocation4], %s268
        %s270 = sand.u32 %s124, 1
        %s271 = smul.addr %s270, 8
        %s272 = scalar_lea.vmem [#allocation8], %s271
        %p273 = pneg %p163
        %p274 = pneg %p160
        %s275 = sand.u32 %s150, 1
        %s276 = scalar_lea.sflag [#allocation10], %s275
        %s277 = sand.u32 %s150, 1
        %s278 = smul.addr %s277, 32
        %s279 = scalar_lea.vmem [#allocation9], %s278
        %v280 = vld [vmem:[%s240] sm:$0xff]
        %v281 = vld [vmem:[#allocation5] sm:$0xff]
        %v282 = vld [vmem:[#allocation5 + $0x8] sm:$0xff]
        %v283 = vld [vmem:[#allocation5 + $0x10] sm:$0xff]
        %v284 = vld [vmem:[#allocation5 + $0x18] sm:$0xff]
        %vm285 = vcmask 261120
        %v287 = vsel %vm285, %v280, 0
        %289 = vmatprep.subr.mxu0 0.0
        %290 = vmatpush1.msra.mxu0 %v281
        %291 = vmatprep.subr.mxu0 0.0
        %292 = vmatpush1.msra.mxu0 %v282
        %293 = vmatprep.subr.mxu0 0.0
        %294 = vmatpush1.msra.mxu0 %v283
        %295 = vmatprep.subr.mxu0 0.0
        %296 = vmatpush1.msra.mxu0 %v284
        %297 = vmatprep.subr.mxu0 0.0
        %298 = vmatpush1.msra.mxu0 0.0
        %299 = vmatprep.subr.mxu0 0.0
        %300 = vmatpush1.msra.mxu0 0.0
        %301 = vmatprep.subr.mxu0 0.0
        %302 = vmatpush1.msra.mxu0 0.0
        %303 = vmatprep.subr.mxu0 0.0
        %304 = vmatpush1.msra.mxu0 0.0
        %305 = vmatprep.subr.mxu0 0.0
        %306 = vmatpush1.msra.mxu0 0.0
        %307 = vmatprep.subr.mxu0 0.0
        %308 = vmatpush1.msra.mxu0 0.0
        %309 = vmatprep.subr.mxu0 0.0
        %310 = vmatpush1.msra.mxu0 0.0
        %311 = vmatprep.subr.mxu0 0.0
        %312 = vmatpush1.msra.mxu0 0.0
        %313 = vmatprep.subr.mxu0 0.0
        %314 = vmatpush1.msra.mxu0 0.0
        %315 = vmatprep.subr.mxu0 0.0
        %316 = vmatpush1.msra.mxu0 0.0
        %317 = vmatprep.subr.mxu0 0.0
        %318 = vmatpush1.msra.mxu0 0.0
        %319 = vmatprep.subr.mxu0 0.0
        %320 = vmatpush1.msra.mxu0 0.0
        %321 = vmatprep.subr.mxu0 0.0
        %322 = vmatpush1.msra.mxu0 0.0
        %323 = vmatprep.subr.mxu0 0.0
        %324 = vmatpush1.msra.mxu0 0.0
        %325 = vmatprep.subr.mxu0 0.0
        %326 = vmatpush1.msra.mxu0 0.0
        %327 = vmatprep.subr.mxu0 0.0
        %328 = vmatpush1.msra.mxu0 0.0
        %329 = vmatprep.subr.mxu0 0.0
        %330 = vmatpush1.msra.mxu0 0.0
        %331 = vmatprep.subr.mxu0 0.0
        %332 = vmatpush1.msra.mxu0 0.0
        %333 = vmatprep.subr.mxu0 0.0
        %334 = vmatpush1.msra.mxu0 0.0
        %335 = vmatprep.subr.mxu0 0.0
        %336 = vmatpush1.msra.mxu0 0.0
        %337 = vmatprep.subr.mxu0 0.0
        %338 = vmatpush1.msra.mxu0 0.0
        %339 = vmatprep.subr.mxu0 0.0
        %340 = vmatpush1.msra.mxu0 0.0
        %341 = vmatprep.subr.mxu0 0.0
        %342 = vmatpush1.msra.mxu0 0.0
        %343 = vmatprep.subr.mxu0 0.0
        %344 = vmatpush1.msra.mxu0 0.0
        %345 = vmatprep.subr.mxu0 0.0
        %346 = vmatpush1.msra.mxu0 0.0
        %347 = vmatprep.subr.mxu0 0.0
        %348 = vmatpush1.msra.mxu0 0.0
        %349 = vmatprep.subr.mxu0 0.0
        %350 = vmatpush1.msra.mxu0 0.0
        %351 = vmatprep.subr.mxu0 0.0
        %352 = vmatpush1.msra.mxu0 0.0
        %353 = vmatprep.mubr.f32.mxu0 0.0
        %354 = vmatmul.mubr.f32.gmra.mrb[0].mxu0 %v287
        %v355 = vpop.f32.mrb[0].mxu0
        %v356 = vadd.f32 0.0, %v355
        %v357 = vpop.f32.mrb[0].mxu0
        %358 = vdwg.mxu0
        %v359 = vmul.f32 %v356, 0.35355338
        %v360 = vlaneseq
        %v361 = vshrl.u32 %v360, 7
        %v362 = vlaneseq
        %v363 = vand.u32 %v362, 127
        %vm364 = vcmp.le.s32.totalorder %v363, %v361
        %366 = vrot.lane.b32.xlu0 %v356, 96
        %v367 = vpop.permute.xlu0 %366
        %vm368 = vcmask 64512
        %v370 = vsel %vm368, %v359, 0
        %v372 = vsel %vm368, %v367, 0
        %374 = vmatprep.subr.mxu0 0.0
        %375 = vmatpush1.xpose.msra.mxu0 %v372
        %376 = vmatprep.subr.mxu0 0.0
        %377 = vmatpush1.xpose.msra.mxu0 0.0
        %378 = vmatprep.subr.mxu0 0.0
        %379 = vmatpush1.xpose.msra.mxu0 0.0
        %380 = vmatprep.subr.mxu0 0.0
        %381 = vmatpush1.xpose.msra.mxu0 0.0
        %382 = vmatprep.subr.mxu0 0.0
        %383 = vmatpush1.xpose.msra.mxu0 0.0
        %384 = vmatprep.subr.mxu0 0.0
        %385 = vmatpush1.xpose.msra.mxu0 0.0
        %386 = vmatprep.subr.mxu0 0.0
        %387 = vmatpush1.xpose.msra.mxu0 0.0
        %388 = vmatprep.subr.mxu0 0.0
        %389 = vmatpush1.xpose.msra.mxu0 0.0
        %390 = vmatprep.subr.mxu0 0.0
        %391 = vmatpush1.xpose.msra.mxu0 0.0
        %392 = vmatprep.subr.mxu0 0.0
        %393 = vmatpush1.xpose.msra.mxu0 0.0
        %394 = vmatprep.subr.mxu0 0.0
        %395 = vmatpush1.xpose.msra.mxu0 0.0
        %396 = vmatprep.subr.mxu0 0.0
        %397 = vmatpush1.xpose.msra.mxu0 0.0
        %398 = vmatprep.subr.mxu0 0.0
        %399 = vmatpush1.xpose.msra.mxu0 0.0
        %400 = vmatprep.subr.mxu0 0.0
        %401 = vmatpush1.xpose.msra.mxu0 0.0
        %402 = vmatprep.subr.mxu0 0.0
        %403 = vmatpush1.xpose.msra.mxu0 0.0
        %404 = vmatprep.subr.mxu0 0.0
        %405 = vmatpush1.xpose.msra.mxu0 0.0
        %406 = vmatprep.subr.mxu0 0.0
        %407 = vmatpush1.xpose.msra.mxu0 0.0
        %408 = vmatprep.subr.mxu0 0.0
        %409 = vmatpush1.xpose.msra.mxu0 0.0
        %410 = vmatprep.subr.mxu0 0.0
        %411 = vmatpush1.xpose.msra.mxu0 0.0
        %412 = vmatprep.subr.mxu0 0.0
        %413 = vmatpush1.xpose.msra.mxu0 0.0
        %414 = vmatprep.subr.mxu0 0.0
        %415 = vmatpush1.xpose.msra.mxu0 0.0
        %416 = vmatprep.subr.mxu0 0.0
        %417 = vmatpush1.xpose.msra.mxu0 0.0
        %418 = vmatprep.subr.mxu0 0.0
        %419 = vmatpush1.xpose.msra.mxu0 0.0
        %420 = vmatprep.subr.mxu0 0.0
        %421 = vmatpush1.xpose.msra.mxu0 0.0
        %422 = vmatprep.subr.mxu0 0.0
        %423 = vmatpush1.xpose.msra.mxu0 0.0
        %424 = vmatprep.subr.mxu0 0.0
        %425 = vmatpush1.xpose.msra.mxu0 0.0
        %426 = vmatprep.subr.mxu0 0.0
        %427 = vmatpush1.xpose.msra.mxu0 0.0
        %428 = vmatprep.subr.mxu0 0.0
        %429 = vmatpush1.xpose.msra.mxu0 0.0
        %430 = vmatprep.subr.mxu0 0.0
        %431 = vmatpush1.xpose.msra.mxu0 0.0
        %432 = vmatprep.subr.mxu0 0.0
        %433 = vmatpush1.xpose.msra.mxu0 0.0
        %434 = vmatprep.subr.mxu0 0.0
        %435 = vmatpush1.xpose.msra.mxu0 0.0
        %436 = vmatprep.subr.mxu0 0.0
        %437 = vmatpush1.xpose.msra.mxu0 0.0
        %438 = vmatprep.mubr.f32.mxu0 0.0
        %439 = vmatmul.mubr.f32.gmra.mrb[0].mxu0 %v370
        %v440 = vpop.f32.mrb[0].mxu0
        %v441 = vadd.f32 0.0, %v440
        %v442 = vpop.f32.mrb[0].mxu0
        %443 = vdwg.mxu0
        %v444 = vsel %vm364, %v441, -inf
        %v445 = vsel %vm368, %v444, -inf
        %446 = vmax.xlane.f32.xlu0 %v445
        %v447 = vpop.xlane.xlu0 %446
        %v448 = vsub.f32 %v444, %v447
        %v449 = vmul.f32 %v448, 1.442695
        %v450 = vpow.pop %v449
        %v451 = vsel %vm368, %v450, 0.0
        %452 = vadd.xlane.f32.xlu0 %v451
        %v453 = vpop.xlane.xlu0 %452
        %v454 = vrcp.pop %v453
        %v455 = vmul.f32 %v450, %v454
        %456 = vrot.lane.b32.xlu0 %v356, 64
        %v457 = vpop.permute.xlu0 %456
        %v460 = vsel %vm368, %v455, 0
        %462 = vmatprep.subr.mxu0 0.0
        %463 = vmatpush1.msra.mxu0 %v457
        %464 = vmatprep.subr.mxu0 0.0
        %465 = vmatpush1.msra.mxu0 0.0
        %466 = vmatprep.subr.mxu0 0.0
        %467 = vmatpush1.msra.mxu0 0.0
        %468 = vmatprep.subr.mxu0 0.0
        %469 = vmatpush1.msra.mxu0 0.0
        %470 = vmatprep.subr.mxu0 0.0
        %471 = vmatpush1.msra.mxu0 0.0
        %472 = vmatprep.subr.mxu0 0.0
        %473 = vmatpush1.msra.mxu0 0.0
        %474 = vmatprep.subr.mxu0 0.0
        %475 = vmatpush1.msra.mxu0 0.0
        %476 = vmatprep.subr.mxu0 0.0
        %477 = vmatpush1.msra.mxu0 0.0
        %478 = vmatprep.subr.mxu0 0.0
        %479 = vmatpush1.msra.mxu0 0.0
        %480 = vmatprep.subr.mxu0 0.0
        %481 = vmatpush1.msra.mxu0 0.0
        %482 = vmatprep.subr.mxu0 0.0
        %483 = vmatpush1.msra.mxu0 0.0
        %484 = vmatprep.subr.mxu0 0.0
        %485 = vmatpush1.msra.mxu0 0.0
        %486 = vmatprep.subr.mxu0 0.0
        %487 = vmatpush1.msra.mxu0 0.0
        %488 = vmatprep.subr.mxu0 0.0
        %489 = vmatpush1.msra.mxu0 0.0
        %490 = vmatprep.subr.mxu0 0.0
        %491 = vmatpush1.msra.mxu0 0.0
        %492 = vmatprep.subr.mxu0 0.0
        %493 = vmatpush1.msra.mxu0 0.0
        %494 = vmatprep.subr.mxu0 0.0
        %495 = vmatpush1.msra.mxu0 0.0
        %496 = vmatprep.subr.mxu0 0.0
        %497 = vmatpush1.msra.mxu0 0.0
        %498 = vmatprep.subr.mxu0 0.0
        %499 = vmatpush1.msra.mxu0 0.0
        %500 = vmatprep.subr.mxu0 0.0
        %501 = vmatpush1.msra.mxu0 0.0
        %502 = vmatprep.subr.mxu0 0.0
        %503 = vmatpush1.msra.mxu0 0.0
        %504 = vmatprep.subr.mxu0 0.0
        %505 = vmatpush1.msra.mxu0 0.0
        %506 = vmatprep.subr.mxu0 0.0
        %507 = vmatpush1.msra.mxu0 0.0
        %508 = vmatprep.subr.mxu0 0.0
        %509 = vmatpush1.msra.mxu0 0.0
        %510 = vmatprep.subr.mxu0 0.0
        %511 = vmatpush1.msra.mxu0 0.0
        %512 = vmatprep.subr.mxu0 0.0
        %513 = vmatpush1.msra.mxu0 0.0
        %514 = vmatprep.subr.mxu0 0.0
        %515 = vmatpush1.msra.mxu0 0.0
        %516 = vmatprep.subr.mxu0 0.0
        %517 = vmatpush1.msra.mxu0 0.0
        %518 = vmatprep.subr.mxu0 0.0
        %519 = vmatpush1.msra.mxu0 0.0
        %520 = vmatprep.subr.mxu0 0.0
        %521 = vmatpush1.msra.mxu0 0.0
        %522 = vmatprep.subr.mxu0 0.0
        %523 = vmatpush1.msra.mxu0 0.0
        %524 = vmatprep.subr.mxu0 0.0
        %525 = vmatpush1.msra.mxu0 0.0
        %526 = vmatprep.mubr.f32.mxu0 0.0
        %527 = vmatmul.mubr.f32.gmra.mrb[0].mxu0 %v460
        %v528 = vpop.f32.mrb[0].mxu0
        %v529 = vadd.f32 0.0, %v528
        %v530 = vpop.f32.mrb[0].mxu0
        %531 = vdwg.mxu0
        %532 = vst.msk [vmem:[%s279] sm:$0xff] %vm368, %v455
        %533 = vrot.lane.b32.xlu0 %v359, 120
        %v534 = vpop.permute.xlu0 %533
        %535 = vrot.lane.b32.xlu0 %v356, 88
        %v536 = vpop.permute.xlu0 %535
        %v537 = vsel %vm368, %v534, 0
        %v539 = vsel %vm368, %v536, 0
        %541 = vmatprep.subr.mxu0 0.0
        %542 = vmatpush1.xpose.msra.mxu0 %v539
        %543 = vmatprep.subr.mxu0 0.0
        %544 = vmatpush1.xpose.msra.mxu0 0.0
        %545 = vmatprep.subr.mxu0 0.0
        %546 = vmatpush1.xpose.msra.mxu0 0.0
        %547 = vmatprep.subr.mxu0 0.0
        %548 = vmatpush1.xpose.msra.mxu0 0.0
        %549 = vmatprep.subr.mxu0 0.0
        %550 = vmatpush1.xpose.msra.mxu0 0.0
        %551 = vmatprep.subr.mxu0 0.0
        %552 = vmatpush1.xpose.msra.mxu0 0.0
        %553 = vmatprep.subr.mxu0 0.0
        %554 = vmatpush1.xpose.msra.mxu0 0.0
        %555 = vmatprep.subr.mxu0 0.0
        %556 = vmatpush1.xpose.msra.mxu0 0.0
        %557 = vmatprep.subr.mxu0 0.0
        %558 = vmatpush1.xpose.msra.mxu0 0.0
        %559 = vmatprep.subr.mxu0 0.0
        %560 = vmatpush1.xpose.msra.mxu0 0.0
        %561 = vmatprep.subr.mxu0 0.0
        %562 = vmatpush1.xpose.msra.mxu0 0.0
        %563 = vmatprep.subr.mxu0 0.0
        %564 = vmatpush1.xpose.msra.mxu0 0.0
        %565 = vmatprep.subr.mxu0 0.0
        %566 = vmatpush1.xpose.msra.mxu0 0.0
        %567 = vmatprep.subr.mxu0 0.0
        %568 = vmatpush1.xpose.msra.mxu0 0.0
        %569 = vmatprep.subr.mxu0 0.0
        %570 = vmatpush1.xpose.msra.mxu0 0.0
        %571 = vmatprep.subr.mxu0 0.0
        %572 = vmatpush1.xpose.msra.mxu0 0.0
        %573 = vmatprep.subr.mxu0 0.0
        %574 = vmatpush1.xpose.msra.mxu0 0.0
        %575 = vmatprep.subr.mxu0 0.0
        %576 = vmatpush1.xpose.msra.mxu0 0.0
        %577 = vmatprep.subr.mxu0 0.0
        %578 = vmatpush1.xpose.msra.mxu0 0.0
        %579 = vmatprep.subr.mxu0 0.0
        %580 = vmatpush1.xpose.msra.mxu0 0.0
        %581 = vmatprep.subr.mxu0 0.0
        %582 = vmatpush1.xpose.msra.mxu0 0.0
        %583 = vmatprep.subr.mxu0 0.0
        %584 = vmatpush1.xpose.msra.mxu0 0.0
        %585 = vmatprep.subr.mxu0 0.0
        %586 = vmatpush1.xpose.msra.mxu0 0.0
        %587 = vmatprep.subr.mxu0 0.0
        %588 = vmatpush1.xpose.msra.mxu0 0.0
        %589 = vmatprep.subr.mxu0 0.0
        %590 = vmatpush1.xpose.msra.mxu0 0.0
        %591 = vmatprep.subr.mxu0 0.0
        %592 = vmatpush1.xpose.msra.mxu0 0.0
        %593 = vmatprep.subr.mxu0 0.0
        %594 = vmatpush1.xpose.msra.mxu0 0.0
        %595 = vmatprep.subr.mxu0 0.0
        %596 = vmatpush1.xpose.msra.mxu0 0.0
        %597 = vmatprep.subr.mxu0 0.0
        %598 = vmatpush1.xpose.msra.mxu0 0.0
        %599 = vmatprep.subr.mxu0 0.0
        %600 = vmatpush1.xpose.msra.mxu0 0.0
        %601 = vmatprep.subr.mxu0 0.0
        %602 = vmatpush1.xpose.msra.mxu0 0.0
        %603 = vmatprep.subr.mxu0 0.0
        %604 = vmatpush1.xpose.msra.mxu0 0.0
        %605 = vmatprep.mubr.f32.mxu0 0.0
        %606 = vmatmul.mubr.f32.gmra.mrb[0].mxu0 %v537
        %v607 = vpop.f32.mrb[0].mxu0
        %v608 = vadd.f32 0.0, %v607
        %v609 = vpop.f32.mrb[0].mxu0
        %610 = vdwg.mxu0
        %v611 = vsel %vm364, %v608, -inf
        %v612 = vsel %vm368, %v611, -inf
        %613 = vmax.xlane.f32.xlu0 %v612
        %v614 = vpop.xlane.xlu0 %613
        %v615 = vsub.f32 %v611, %v614
        %v616 = vmul.f32 %v615, 1.442695
        %v617 = vpow.pop %v616
        %v618 = vsel %vm368, %v617, 0.0
        %619 = vadd.xlane.f32.xlu0 %v618
        %v620 = vpop.xlane.xlu0 %619
        %v621 = vrcp.pop %v620
        %v622 = vmul.f32 %v617, %v621
        %623 = vrot.lane.b32.xlu0 %v356, 56
        %v624 = vpop.permute.xlu0 %623
        %v627 = vsel %vm368, %v622, 0
        %629 = vmatprep.subr.mxu0 0.0
        %630 = vmatpush1.msra.mxu0 %v624
        %631 = vmatprep.subr.mxu0 0.0
        %632 = vmatpush1.msra.mxu0 0.0
        %633 = vmatprep.subr.mxu0 0.0
        %634 = vmatpush1.msra.mxu0 0.0
        %635 = vmatprep.subr.mxu0 0.0
        %636 = vmatpush1.msra.mxu0 0.0
        %637 = vmatprep.subr.mxu0 0.0
        %638 = vmatpush1.msra.mxu0 0.0
        %639 = vmatprep.subr.mxu0 0.0
        %640 = vmatpush1.msra.mxu0 0.0
        %641 = vmatprep.subr.mxu0 0.0
        %642 = vmatpush1.msra.mxu0 0.0
        %643 = vmatprep.subr.mxu0 0.0
        %644 = vmatpush1.msra.mxu0 0.0
        %645 = vmatprep.subr.mxu0 0.0
        %646 = vmatpush1.msra.mxu0 0.0
        %647 = vmatprep.subr.mxu0 0.0
        %648 = vmatpush1.msra.mxu0 0.0
        %649 = vmatprep.subr.mxu0 0.0
        %650 = vmatpush1.msra.mxu0 0.0
        %651 = vmatprep.subr.mxu0 0.0
        %652 = vmatpush1.msra.mxu0 0.0
        %653 = vmatprep.subr.mxu0 0.0
        %654 = vmatpush1.msra.mxu0 0.0
        %655 = vmatprep.subr.mxu0 0.0
        %656 = vmatpush1.msra.mxu0 0.0
        %657 = vmatprep.subr.mxu0 0.0
        %658 = vmatpush1.msra.mxu0 0.0
        %659 = vmatprep.subr.mxu0 0.0
        %660 = vmatpush1.msra.mxu0 0.0
        %661 = vmatprep.subr.mxu0 0.0
        %662 = vmatpush1.msra.mxu0 0.0
        %663 = vmatprep.subr.mxu0 0.0
        %664 = vmatpush1.msra.mxu0 0.0
        %665 = vmatprep.subr.mxu0 0.0
        %666 = vmatpush1.msra.mxu0 0.0
        %667 = vmatprep.subr.mxu0 0.0
        %668 = vmatpush1.msra.mxu0 0.0
        %669 = vmatprep.subr.mxu0 0.0
        %670 = vmatpush1.msra.mxu0 0.0
        %671 = vmatprep.subr.mxu0 0.0
        %672 = vmatpush1.msra.mxu0 0.0
        %673 = vmatprep.subr.mxu0 0.0
        %674 = vmatpush1.msra.mxu0 0.0
        %675 = vmatprep.subr.mxu0 0.0
        %676 = vmatpush1.msra.mxu0 0.0
        %677 = vmatprep.subr.mxu0 0.0
        %678 = vmatpush1.msra.mxu0 0.0
        %679 = vmatprep.subr.mxu0 0.0
        %680 = vmatpush1.msra.mxu0 0.0
        %681 = vmatprep.subr.mxu0 0.0
        %682 = vmatpush1.msra.mxu0 0.0
        %683 = vmatprep.subr.mxu0 0.0
        %684 = vmatpush1.msra.mxu0 0.0
        %685 = vmatprep.subr.mxu0 0.0
        %686 = vmatpush1.msra.mxu0 0.0
        %687 = vmatprep.subr.mxu0 0.0
        %688 = vmatpush1.msra.mxu0 0.0
        %689 = vmatprep.subr.mxu0 0.0
        %690 = vmatpush1.msra.mxu0 0.0
        %691 = vmatprep.subr.mxu0 0.0
        %692 = vmatpush1.msra.mxu0 0.0
        %693 = vmatprep.mubr.f32.mxu0 0.0
        %694 = vmatmul.mubr.f32.gmra.mrb[0].mxu0 %v627
        %v695 = vpop.f32.mrb[0].mxu0
        %v696 = vadd.f32 0.0, %v695
        %v697 = vpop.f32.mrb[0].mxu0
        %698 = vdwg.mxu0
        %s699 = scalar_lea.vmem %s279, 8 [#allocation9]
        %700 = vst.msk [vmem:[%s699] sm:$0xff] %vm368, %v622
        %701 = vrot.lane.b32.xlu0 %v359, 112
        %v702 = vpop.permute.xlu0 %701
        %703 = vrot.lane.b32.xlu0 %v356, 80
        %v704 = vpop.permute.xlu0 %703
        %v705 = vsel %vm368, %v702, 0
        %v707 = vsel %vm368, %v704, 0
        %709 = vmatprep.subr.mxu0 0.0
        %710 = vmatpush1.xpose.msra.mxu0 %v707
        %711 = vmatprep.subr.mxu0 0.0
        %712 = vmatpush1.xpose.msra.mxu0 0.0
        %713 = vmatprep.subr.mxu0 0.0
        %714 = vmatpush1.xpose.msra.mxu0 0.0
        %715 = vmatprep.subr.mxu0 0.0
        %716 = vmatpush1.xpose.msra.mxu0 0.0
        %717 = vmatprep.subr.mxu0 0.0
        %718 = vmatpush1.xpose.msra.mxu0 0.0
        %719 = vmatprep.subr.mxu0 0.0
        %720 = vmatpush1.xpose.msra.mxu0 0.0
        %721 = vmatprep.subr.mxu0 0.0
        %722 = vmatpush1.xpose.msra.mxu0 0.0
        %723 = vmatprep.subr.mxu0 0.0
        %724 = vmatpush1.xpose.msra.mxu0 0.0
        %725 = vmatprep.subr.mxu0 0.0
        %726 = vmatpush1.xpose.msra.mxu0 0.0
        %727 = vmatprep.subr.mxu0 0.0
        %728 = vmatpush1.xpose.msra.mxu0 0.0
        %729 = vmatprep.subr.mxu0 0.0
        %730 = vmatpush1.xpose.msra.mxu0 0.0
        %731 = vmatprep.subr.mxu0 0.0
        %732 = vmatpush1.xpose.msra.mxu0 0.0
        %733 = vmatprep.subr.mxu0 0.0
        %734 = vmatpush1.xpose.msra.mxu0 0.0
        %735 = vmatprep.subr.mxu0 0.0
        %736 = vmatpush1.xpose.msra.mxu0 0.0
        %737 = vmatprep.subr.mxu0 0.0
        %738 = vmatpush1.xpose.msra.mxu0 0.0
        %739 = vmatprep.subr.mxu0 0.0
        %740 = vmatpush1.xpose.msra.mxu0 0.0
        %741 = vmatprep.subr.mxu0 0.0
        %742 = vmatpush1.xpose.msra.mxu0 0.0
        %743 = vmatprep.subr.mxu0 0.0
        %744 = vmatpush1.xpose.msra.mxu0 0.0
        %745 = vmatprep.subr.mxu0 0.0
        %746 = vmatpush1.xpose.msra.mxu0 0.0
        %747 = vmatprep.subr.mxu0 0.0
        %748 = vmatpush1.xpose.msra.mxu0 0.0
        %749 = vmatprep.subr.mxu0 0.0
        %750 = vmatpush1.xpose.msra.mxu0 0.0
        %751 = vmatprep.subr.mxu0 0.0
        %752 = vmatpush1.xpose.msra.mxu0 0.0
        %753 = vmatprep.subr.mxu0 0.0
        %754 = vmatpush1.xpose.msra.mxu0 0.0
        %755 = vmatprep.subr.mxu0 0.0
        %756 = vmatpush1.xpose.msra.mxu0 0.0
        %757 = vmatprep.subr.mxu0 0.0
        %758 = vmatpush1.xpose.msra.mxu0 0.0
        %759 = vmatprep.subr.mxu0 0.0
        %760 = vmatpush1.xpose.msra.mxu0 0.0
        %761 = vmatprep.subr.mxu0 0.0
        %762 = vmatpush1.xpose.msra.mxu0 0.0
        %763 = vmatprep.subr.mxu0 0.0
        %764 = vmatpush1.xpose.msra.mxu0 0.0
        %765 = vmatprep.subr.mxu0 0.0
        %766 = vmatpush1.xpose.msra.mxu0 0.0
        %767 = vmatprep.subr.mxu0 0.0
        %768 = vmatpush1.xpose.msra.mxu0 0.0
        %769 = vmatprep.subr.mxu0 0.0
        %770 = vmatpush1.xpose.msra.mxu0 0.0
        %771 = vmatprep.subr.mxu0 0.0
        %772 = vmatpush1.xpose.msra.mxu0 0.0
        %773 = vmatprep.mubr.f32.mxu0 0.0
        %774 = vmatmul.mubr.f32.gmra.mrb[0].mxu0 %v705
        %v775 = vpop.f32.mrb[0].mxu0
        %v776 = vadd.f32 0.0, %v775
        %v777 = vpop.f32.mrb[0].mxu0
        %778 = vdwg.mxu0
        %v779 = vsel %vm364, %v776, -inf
        %v780 = vsel %vm368, %v779, -inf
        %781 = vmax.xlane.f32.xlu0 %v780
        %v782 = vpop.xlane.xlu0 %781
        %v783 = vsub.f32 %v779, %v782
        %v784 = vmul.f32 %v783, 1.442695
        %v785 = vpow.pop %v784
        %v786 = vsel %vm368, %v785, 0.0
        %787 = vadd.xlane.f32.xlu0 %v786
        %v788 = vpop.xlane.xlu0 %787
        %v789 = vrcp.pop %v788
        %v790 = vmul.f32 %v785, %v789
        %791 = vrot.lane.b32.xlu0 %v356, 48
        %v792 = vpop.permute.xlu0 %791
        %v795 = vsel %vm368, %v790, 0
        %797 = vmatprep.subr.mxu0 0.0
        %798 = vmatpush1.msra.mxu0 %v792
        %799 = vmatprep.subr.mxu0 0.0
        %800 = vmatpush1.msra.mxu0 0.0
        %801 = vmatprep.subr.mxu0 0.0
        %802 = vmatpush1.msra.mxu0 0.0
        %803 = vmatprep.subr.mxu0 0.0
        %804 = vmatpush1.msra.mxu0 0.0
        %805 = vmatprep.subr.mxu0 0.0
        %806 = vmatpush1.msra.mxu0 0.0
        %807 = vmatprep.subr.mxu0 0.0
        %808 = vmatpush1.msra.mxu0 0.0
        %809 = vmatprep.subr.mxu0 0.0
        %810 = vmatpush1.msra.mxu0 0.0
        %811 = vmatprep.subr.mxu0 0.0
        %812 = vmatpush1.msra.mxu0 0.0
        %813 = vmatprep.subr.mxu0 0.0
        %814 = vmatpush1.msra.mxu0 0.0
        %815 = vmatprep.subr.mxu0 0.0
        %816 = vmatpush1.msra.mxu0 0.0
        %817 = vmatprep.subr.mxu0 0.0
        %818 = vmatpush1.msra.mxu0 0.0
        %819 = vmatprep.subr.mxu0 0.0
        %820 = vmatpush1.msra.mxu0 0.0
        %821 = vmatprep.subr.mxu0 0.0
        %822 = vmatpush1.msra.mxu0 0.0
        %823 = vmatprep.subr.mxu0 0.0
        %824 = vmatpush1.msra.mxu0 0.0
        %825 = vmatprep.subr.mxu0 0.0
        %826 = vmatpush1.msra.mxu0 0.0
        %827 = vmatprep.subr.mxu0 0.0
        %828 = vmatpush1.msra.mxu0 0.0
        %829 = vmatprep.subr.mxu0 0.0
        %830 = vmatpush1.msra.mxu0 0.0
        %831 = vmatprep.subr.mxu0 0.0
        %832 = vmatpush1.msra.mxu0 0.0
        %833 = vmatprep.subr.mxu0 0.0
        %834 = vmatpush1.msra.mxu0 0.0
        %835 = vmatprep.subr.mxu0 0.0
        %836 = vmatpush1.msra.mxu0 0.0
        %837 = vmatprep.subr.mxu0 0.0
        %838 = vmatpush1.msra.mxu0 0.0
        %839 = vmatprep.subr.mxu0 0.0
        %840 = vmatpush1.msra.mxu0 0.0
        %841 = vmatprep.subr.mxu0 0.0
        %842 = vmatpush1.msra.mxu0 0.0
        %843 = vmatprep.subr.mxu0 0.0
        %844 = vmatpush1.msra.mxu0 0.0
        %845 = vmatprep.subr.mxu0 0.0
        %846 = vmatpush1.msra.mxu0 0.0
        %847 = vmatprep.subr.mxu0 0.0
        %848 = vmatpush1.msra.mxu0 0.0
        %849 = vmatprep.subr.mxu0 0.0
        %850 = vmatpush1.msra.mxu0 0.0
        %851 = vmatprep.subr.mxu0 0.0
        %852 = vmatpush1.msra.mxu0 0.0
        %853 = vmatprep.subr.mxu0 0.0
        %854 = vmatpush1.msra.mxu0 0.0
        %855 = vmatprep.subr.mxu0 0.0
        %856 = vmatpush1.msra.mxu0 0.0
        %857 = vmatprep.subr.mxu0 0.0
        %858 = vmatpush1.msra.mxu0 0.0
        %859 = vmatprep.subr.mxu0 0.0
        %860 = vmatpush1.msra.mxu0 0.0
        %861 = vmatprep.mubr.f32.mxu0 0.0
        %862 = vmatmul.mubr.f32.gmra.mrb[0].mxu0 %v795
        %v863 = vpop.f32.mrb[0].mxu0
        %v864 = vadd.f32 0.0, %v863
        %v865 = vpop.f32.mrb[0].mxu0
        %866 = vdwg.mxu0
        %s867 = scalar_lea.vmem %s279, 16 [#allocation9]
        %868 = vst.msk [vmem:[%s867] sm:$0xff] %vm368, %v790
        %869 = vrot.lane.b32.xlu0 %v359, 104
        %v870 = vpop.permute.xlu0 %869
        %871 = vrot.lane.b32.xlu0 %v356, 72
        %v872 = vpop.permute.xlu0 %871
        %v873 = vsel %vm368, %v870, 0
        %v875 = vsel %vm368, %v872, 0
        %877 = vmatprep.subr.mxu0 0.0
        %878 = vmatpush1.xpose.msra.mxu0 %v875
        %879 = vmatprep.subr.mxu0 0.0
        %880 = vmatpush1.xpose.msra.mxu0 0.0
        %881 = vmatprep.subr.mxu0 0.0
        %882 = vmatpush1.xpose.msra.mxu0 0.0
        %883 = vmatprep.subr.mxu0 0.0
        %884 = vmatpush1.xpose.msra.mxu0 0.0
        %885 = vmatprep.subr.mxu0 0.0
        %886 = vmatpush1.xpose.msra.mxu0 0.0
        %887 = vmatprep.subr.mxu0 0.0
        %888 = vmatpush1.xpose.msra.mxu0 0.0
        %889 = vmatprep.subr.mxu0 0.0
        %890 = vmatpush1.xpose.msra.mxu0 0.0
        %891 = vmatprep.subr.mxu0 0.0
        %892 = vmatpush1.xpose.msra.mxu0 0.0
        %893 = vmatprep.subr.mxu0 0.0
        %894 = vmatpush1.xpose.msra.mxu0 0.0
        %895 = vmatprep.subr.mxu0 0.0
        %896 = vmatpush1.xpose.msra.mxu0 0.0
        %897 = vmatprep.subr.mxu0 0.0
        %898 = vmatpush1.xpose.msra.mxu0 0.0
        %899 = vmatprep.subr.mxu0 0.0
        %900 = vmatpush1.xpose.msra.mxu0 0.0
        %901 = vmatprep.subr.mxu0 0.0
        %902 = vmatpush1.xpose.msra.mxu0 0.0
        %903 = vmatprep.subr.mxu0 0.0
        %904 = vmatpush1.xpose.msra.mxu0 0.0
        %905 = vmatprep.subr.mxu0 0.0
        %906 = vmatpush1.xpose.msra.mxu0 0.0
        %907 = vmatprep.subr.mxu0 0.0
        %908 = vmatpush1.xpose.msra.mxu0 0.0
        %909 = vmatprep.subr.mxu0 0.0
        %910 = vmatpush1.xpose.msra.mxu0 0.0
        %911 = vmatprep.subr.mxu0 0.0
        %912 = vmatpush1.xpose.msra.mxu0 0.0
        %913 = vmatprep.subr.mxu0 0.0
        %914 = vmatpush1.xpose.msra.mxu0 0.0
        %915 = vmatprep.subr.mxu0 0.0
        %916 = vmatpush1.xpose.msra.mxu0 0.0
        %917 = vmatprep.subr.mxu0 0.0
        %918 = vmatpush1.xpose.msra.mxu0 0.0
        %919 = vmatprep.subr.mxu0 0.0
        %920 = vmatpush1.xpose.msra.mxu0 0.0
        %921 = vmatprep.subr.mxu0 0.0
        %922 = vmatpush1.xpose.msra.mxu0 0.0
        %923 = vmatprep.subr.mxu0 0.0
        %924 = vmatpush1.xpose.msra.mxu0 0.0
        %925 = vmatprep.subr.mxu0 0.0
        %926 = vmatpush1.xpose.msra.mxu0 0.0
        %927 = vmatprep.subr.mxu0 0.0
        %928 = vmatpush1.xpose.msra.mxu0 0.0
        %929 = vmatprep.subr.mxu0 0.0
        %930 = vmatpush1.xpose.msra.mxu0 0.0
        %931 = vmatprep.subr.mxu0 0.0
        %932 = vmatpush1.xpose.msra.mxu0 0.0
        %933 = vmatprep.subr.mxu0 0.0
        %934 = vmatpush1.xpose.msra.mxu0 0.0
        %935 = vmatprep.subr.mxu0 0.0
        %936 = vmatpush1.xpose.msra.mxu0 0.0
        %937 = vmatprep.subr.mxu0 0.0
        %938 = vmatpush1.xpose.msra.mxu0 0.0
        %939 = vmatprep.subr.mxu0 0.0
        %940 = vmatpush1.xpose.msra.mxu0 0.0
        %941 = vmatprep.mubr.f32.mxu0 0.0
        %942 = vmatmul.mubr.f32.gmra.mrb[0].mxu0 %v873
        %v943 = vpop.f32.mrb[0].mxu0
        %v944 = vadd.f32 0.0, %v943
        %v945 = vpop.f32.mrb[0].mxu0
        %946 = vdwg.mxu0
        %v947 = vsel %vm364, %v944, -inf
        %v948 = vsel %vm368, %v947, -inf
        %949 = vmax.xlane.f32.xlu0 %v948
        %v950 = vpop.xlane.xlu0 %949
        %v951 = vsub.f32 %v947, %v950
        %v952 = vmul.f32 %v951, 1.442695
        %v953 = vpow.pop %v952
        %v954 = vsel %vm368, %v953, 0.0
        %955 = vadd.xlane.f32.xlu0 %v954
        %v956 = vpop.xlane.xlu0 %955
        %v957 = vrcp.pop %v956
        %v958 = vmul.f32 %v953, %v957
        %959 = vrot.lane.b32.xlu0 %v356, 40
        %v960 = vpop.permute.xlu0 %959
        %v963 = vsel %vm368, %v958, 0
        %965 = vmatprep.subr.mxu0 0.0
        %966 = vmatpush1.msra.mxu0 %v960
        %967 = vmatprep.subr.mxu0 0.0
        %968 = vmatpush1.msra.mxu0 0.0
        %969 = vmatprep.subr.mxu0 0.0
        %970 = vmatpush1.msra.mxu0 0.0
        %971 = vmatprep.subr.mxu0 0.0
        %972 = vmatpush1.msra.mxu0 0.0
        %973 = vmatprep.subr.mxu0 0.0
        %974 = vmatpush1.msra.mxu0 0.0
        %975 = vmatprep.subr.mxu0 0.0
        %976 = vmatpush1.msra.mxu0 0.0
        %977 = vmatprep.subr.mxu0 0.0
        %978 = vmatpush1.msra.mxu0 0.0
        %979 = vmatprep.subr.mxu0 0.0
        %980 = vmatpush1.msra.mxu0 0.0
        %981 = vmatprep.subr.mxu0 0.0
        %982 = vmatpush1.msra.mxu0 0.0
        %983 = vmatprep.subr.mxu0 0.0
        %984 = vmatpush1.msra.mxu0 0.0
        %985 = vmatprep.subr.mxu0 0.0
        %986 = vmatpush1.msra.mxu0 0.0
        %987 = vmatprep.subr.mxu0 0.0
        %988 = vmatpush1.msra.mxu0 0.0
        %989 = vmatprep.subr.mxu0 0.0
        %990 = vmatpush1.msra.mxu0 0.0
        %991 = vmatprep.subr.mxu0 0.0
        %992 = vmatpush1.msra.mxu0 0.0
        %993 = vmatprep.subr.mxu0 0.0
        %994 = vmatpush1.msra.mxu0 0.0
        %995 = vmatprep.subr.mxu0 0.0
        %996 = vmatpush1.msra.mxu0 0.0
        %997 = vmatprep.subr.mxu0 0.0
        %998 = vmatpush1.msra.mxu0 0.0
        %999 = vmatprep.subr.mxu0 0.0
        %1000 = vmatpush1.msra.mxu0 0.0
        %1001 = vmatprep.subr.mxu0 0.0
        %1002 = vmatpush1.msra.mxu0 0.0
        %1003 = vmatprep.subr.mxu0 0.0
        %1004 = vmatpush1.msra.mxu0 0.0
        %1005 = vmatprep.subr.mxu0 0.0
        %1006 = vmatpush1.msra.mxu0 0.0
        %1007 = vmatprep.subr.mxu0 0.0
        %1008 = vmatpush1.msra.mxu0 0.0
        %1009 = vmatprep.subr.mxu0 0.0
        %1010 = vmatpush1.msra.mxu0 0.0
        %1011 = vmatprep.subr.mxu0 0.0
        %1012 = vmatpush1.msra.mxu0 0.0
        %1013 = vmatprep.subr.mxu0 0.0
        %1014 = vmatpush1.msra.mxu0 0.0
        %1015 = vmatprep.subr.mxu0 0.0
        %1016 = vmatpush1.msra.mxu0 0.0
        %1017 = vmatprep.subr.mxu0 0.0
        %1018 = vmatpush1.msra.mxu0 0.0
        %1019 = vmatprep.subr.mxu0 0.0
        %1020 = vmatpush1.msra.mxu0 0.0
        %1021 = vmatprep.subr.mxu0 0.0
        %1022 = vmatpush1.msra.mxu0 0.0
        %1023 = vmatprep.subr.mxu0 0.0
        %1024 = vmatpush1.msra.mxu0 0.0
        %1025 = vmatprep.subr.mxu0 0.0
        %1026 = vmatpush1.msra.mxu0 0.0
        %1027 = vmatprep.subr.mxu0 0.0
        %1028 = vmatpush1.msra.mxu0 0.0
        %1029 = vmatprep.mubr.f32.mxu0 0.0
        %1030 = vmatmul.mubr.f32.gmra.mrb[0].mxu0 %v963
        %v1031 = vpop.f32.mrb[0].mxu0
        %v1032 = vadd.f32 0.0, %v1031
        %v1033 = vpop.f32.mrb[0].mxu0
        %1034 = vdwg.mxu0
        %s1035 = scalar_lea.vmem %s279, 24 [#allocation9]
        %1036 = vst.msk [vmem:[%s1035] sm:$0xff] %vm368, %v958
        %1038 = vrot.lane.b32.xlu0 %v696, 8
        %v1039 = vpop.permute.xlu0 %1038
        %1042 = vrot.lane.b32.xlu0 %v864, 16
        %v1043 = vpop.permute.xlu0 %1042
        %1046 = vrot.lane.b32.xlu0 %v1032, 24
        %v1047 = vpop.permute.xlu0 %1046
        %v1049 = vsel %vm368, %v529, %v1039
        %vm1050 = vcmask 130048
        %v1051 = vsel %vm1050, %v1049, %v1043
        %vm1052 = vcmask 195584
        %v1053 = vsel %vm1052, %v1051, %v1047
        %v1054 = vld [vmem:[#allocation7] sm:$0xff]
        %v1055 = vld [vmem:[#allocation7 + $0x8] sm:$0xff]
        %v1056 = vld [vmem:[#allocation7 + $0x10] sm:$0xff]
        %v1057 = vld [vmem:[#allocation7 + $0x18] sm:$0xff]
        %v1058 = vld [vmem:[%s3] sm:$0x1]
        %v1060 = vlaneseq
        %v1061 = vshrl.u32 %v1060, 7
        %v1062 = vsub.s32 0, %v1061
        %v1063 = vrot.slane %v1058, %v1062
        %v1066 = vsel %vm285, %v1053, 0
        %1068 = vmatprep.subr.mxu0 0.0
        %1069 = vmatpush1.msra.mxu0 %v1054
        %1070 = vmatprep.subr.mxu0 0.0
        %1071 = vmatpush1.msra.mxu0 %v1055
        %1072 = vmatprep.subr.mxu0 0.0
        %1073 = vmatpush1.msra.mxu0 %v1056
        %1074 = vmatprep.subr.mxu0 0.0
        %1075 = vmatpush1.msra.mxu0 %v1057
        %1076 = vmatprep.subr.mxu0 0.0
        %1077 = vmatpush1.msra.mxu0 0.0
        %1078 = vmatprep.subr.mxu0 0.0
        %1079 = vmatpush1.msra.mxu0 0.0
        %1080 = vmatprep.subr.mxu0 0.0
        %1081 = vmatpush1.msra.mxu0 0.0
        %1082 = vmatprep.subr.mxu0 0.0
        %1083 = vmatpush1.msra.mxu0 0.0
        %1084 = vmatprep.subr.mxu0 0.0
        %1085 = vmatpush1.msra.mxu0 0.0
        %1086 = vmatprep.subr.mxu0 0.0
        %1087 = vmatpush1.msra.mxu0 0.0
        %1088 = vmatprep.subr.mxu0 0.0
        %1089 = vmatpush1.msra.mxu0 0.0
        %1090 = vmatprep.subr.mxu0 0.0
        %1091 = vmatpush1.msra.mxu0 0.0
        %1092 = vmatprep.subr.mxu0 0.0
        %1093 = vmatpush1.msra.mxu0 0.0
        %1094 = vmatprep.subr.mxu0 0.0
        %1095 = vmatpush1.msra.mxu0 0.0
        %1096 = vmatprep.subr.mxu0 0.0
        %1097 = vmatpush1.msra.mxu0 0.0
        %1098 = vmatprep.subr.mxu0 0.0
        %1099 = vmatpush1.msra.mxu0 0.0
        %1100 = vmatprep.subr.mxu0 0.0
        %1101 = vmatpush1.msra.mxu0 0.0
        %1102 = vmatprep.subr.mxu0 0.0
        %1103 = vmatpush1.msra.mxu0 0.0
        %1104 = vmatprep.subr.mxu0 0.0
        %1105 = vmatpush1.msra.mxu0 0.0
        %1106 = vmatprep.subr.mxu0 0.0
        %1107 = vmatpush1.msra.mxu0 0.0
        %1108 = vmatprep.subr.mxu0 0.0
        %1109 = vmatpush1.msra.mxu0 0.0
        %1110 = vmatprep.subr.mxu0 0.0
        %1111 = vmatpush1.msra.mxu0 0.0
        %1112 = vmatprep.subr.mxu0 0.0
        %1113 = vmatpush1.msra.mxu0 0.0
        %1114 = vmatprep.subr.mxu0 0.0
        %1115 = vmatpush1.msra.mxu0 0.0
        %1116 = vmatprep.subr.mxu0 0.0
        %1117 = vmatpush1.msra.mxu0 0.0
        %1118 = vmatprep.subr.mxu0 0.0
        %1119 = vmatpush1.msra.mxu0 0.0
        %1120 = vmatprep.subr.mxu0 0.0
        %1121 = vmatpush1.msra.mxu0 0.0
        %1122 = vmatprep.subr.mxu0 0.0
        %1123 = vmatpush1.msra.mxu0 0.0
        %1124 = vmatprep.subr.mxu0 0.0
        %1125 = vmatpush1.msra.mxu0 0.0
        %1126 = vmatprep.subr.mxu0 0.0
        %1127 = vmatpush1.msra.mxu0 0.0
        %1128 = vmatprep.subr.mxu0 0.0
        %1129 = vmatpush1.msra.mxu0 0.0
        %1130 = vmatprep.subr.mxu0 0.0
        %1131 = vmatpush1.msra.mxu0 0.0
        %1132 = vmatprep.mubr.f32.mxu0 0.0
        %1133 = vmatmul.mubr.f32.gmra.mrb[0].mxu0 %v1066
        %v1134 = vpop.f32.mrb[0].mxu0
        %v1135 = vadd.f32 %v1063, %v1134
        %v1136 = vpop.f32.mrb[0].mxu0
        %1137 = vdwg.mxu0
        %1138 = vst.msk [vmem:[%s272] sm:$0xff] %vm285, %v1135
        %s1139 = sand.u32 %s124, 1
        %s1140 = scalar_lea.sflag [#allocation4], %s1139
        %s1141 = sand.u32 %s124, 1
        %s1142 = smul.addr %s1141, 8
        %s1143 = scalar_lea.vmem [#allocation8], %s1142
        %s1144 = sand.u32 %s150, 1
        %s1145 = scalar_lea.sflag [#allocation10], %s1144
        %s1146 = sand.u32 %s150, 1
        %s1147 = smul.addr %s1146, 32
        %s1148 = scalar_lea.vmem [#allocation9], %s1147
        // Predicated region
        $region49: #{tpu_custom_call.1} parent=35 // pred_check
          %p1149 = pneg %p134
        $region50: #{tpu_custom_call.1} parent=35 // pred_check_branch
          %1151 = sbr.rel (%p1149) target = $region52
        $region51: #{tpu_custom_call.1} parent=35 // pred_region
          %s1153 = ssub.s32 128, 128
          %1154 = vsyncadd %s1140, %s1153
          %s1155 = smul.addr %s27, 128
          %s1156 = scalar_lea.hbm %s4, %s1155
          %s1158 = sshll.u32 %s1143, 4
          %s1159 = int_to_ptr.vmem [resolvable:$true] %s1158
          %1161 = dma.vmem_to_hbm [thread:$0]  %s1159, 128, %s1156, %s1140
        $region52: #{tpu_custom_call.1} parent=35 // pred_fallthru
          _
        // Predicated region
        $region53: #{tpu_custom_call.1} parent=35 // pred_check
          %p1162 = pneg %p160
        $region54: #{tpu_custom_call.1} parent=35 // pred_check_branch
          %1164 = sbr.rel (%p1162) target = $region56
        $region55: #{tpu_custom_call.1} parent=35 // pred_region
          %s1166 = ssub.s32 512, 512
          %1167 = vsyncadd %s1145, %s1166
          %s1168 = smul.addr %s27, 4
          %s1169 = smul.addr %s1168, 128
          %s1170 = scalar_lea.hbm %s5, %s1169
          %s1171 = sshll.u32 %s1148, 4
          %s1172 = int_to_ptr.vmem [resolvable:$true] %s1171
          %1177 = dma.vmem_to_hbm [thread:$0]  %s1172, 512, %s1170, %s1145, 128, 128, 8
        $region56: #{tpu_custom_call.1} parent=35 // pred_fallthru
          _
      $region36: #{tpu_custom_call.1} parent=5 // pred_fallthru
        _
      %p1178 = scmp.le.s32.totalorder 2, %s22
      // Predicated region
      $region57: #{tpu_custom_call.1} parent=5 // pred_check
        %p1179 = pneg %p1178
      $region58: #{tpu_custom_call.1} parent=5 // pred_check_branch
        %1181 = sbr.rel (%p1179) target = $region60
      $region59: #{tpu_custom_call.1} parent=5 // pred_region
        %s1182 = ssub.s32 %s22, 2
        // Predicated region
        $region61: #{tpu_custom_call.1} parent=59 // pred_check
          %p1183 = pneg %p140
        $region62: #{tpu_custom_call.1} parent=59 // pred_check_branch
          %1185 = sbr.rel (%p1183) target = $region64
        $region63: #{tpu_custom_call.1} parent=59 // pred_region
          %s1186 = sand.u32 %s125, 1
          %s1187 = scalar_lea.sflag [#allocation4], %s1186
          %s1188 = sand.u32 %s125, 1
          %s1189 = smul.addr %s1188, 8
          %s1190 = scalar_lea.vmem [#allocation8], %s1189
          %1191 = dma.done %s1187, 128
        $region64: #{tpu_custom_call.1} parent=59 // pred_fallthru
          _
        // Predicated region
        $region65: #{tpu_custom_call.1} parent=59 // pred_check
          %p1192 = pneg %p166
        $region66: #{tpu_custom_call.1} parent=59 // pred_check_branch
          %1194 = sbr.rel (%p1192) target = $region68
        $region67: #{tpu_custom_call.1} parent=59 // pred_region
          %s1195 = sand.u32 %s151, 1
          %s1196 = scalar_lea.sflag [#allocation10], %s1195
          %s1197 = sand.u32 %s151, 1
          %s1198 = smul.addr %s1197, 32
          %s1199 = scalar_lea.vmem [#allocation9], %s1198
          %1200 = dma.done %s1196, 512
        $region68: #{tpu_custom_call.1} parent=59 // pred_fallthru
          _
      $region60: #{tpu_custom_call.1} parent=5 // pred_fallthru
        _
    $region6: #{tpu_custom_call.1} parent=1 // loop_footer
      %s26 = sadd.s32 1, %s22
    $region7: #{tpu_custom_call.1} parent=1 // loop_footer_branch
      %21 = sbr.rel target = $region3
    $region8: #{tpu_custom_call.1} parent=1 // loop_exit
      _
    %1201 = vsyncpa [#allocation3], 1
    %s1202 = scalar_lea.sflag [#allocation3], 1
    %1203 = vsyncpa %s1202, 1
    %1204 = vsyncpa [#allocation6], 1
    %1205 = vsyncpa [#allocation4], 1
    %s1206 = scalar_lea.sflag [#allocation4], 1
    %1207 = vsyncpa %s1206, 1
    %1208 = vsyncpa [#allocation10], 1
    %s1209 = scalar_lea.sflag [#allocation10], 1
    %1210 = vsyncpa %s1209, 1

</llo_original>
